<compile_context>
chip_gen: v7x
topology: tpu7x:2x2x1
jax: 0.10.0
libtpu: 0.0.40
codegen_flags: <defaults>
</compile_context>

<pallas_src>
import jax
import jax.numpy as jnp
from jax.experimental import pallas as pl
from jax.experimental.pallas import tpu as pltpu

N_PAD = 128    # lane-dense output slab width (true n_out columns sliced in wrapper)
SUBLANE = 8    # pad batch rows to a full sublane -> unmasked output store


def mlp_kernel(c_ref,     # VMEM (B_PAD, V)      scaled counts = one_hot.sum(1) / mask.sum(1)
               emb_ref,   # VMEM (V, n_in)       whole (tiny) embedding table
               w1_ref,    # VMEM (n_in, n_mid)
               b1_ref,    # VMEM (1, n_mid)
               w2_ref,    # VMEM (n_mid, N_PAD)  zero-padded columns
               b2_ref,    # VMEM (1, N_PAD)
               out_ref):  # VMEM (B_PAD, N_PAD)
    # x3 = (counts / mask.sum) @ E  ==  embd(ids).sum(dim=1) / mask.sum(dim=1)
    x3 = jnp.dot(c_ref[...], emb_ref[...], preferred_element_type=jnp.float32)
    # h1 = tanh(l1(x3))
    h1 = jnp.tanh(
        jnp.dot(x3, w1_ref[...], preferred_element_type=jnp.float32) + b1_ref[...])
    # h2 = l2(h1) -- one unmasked, lane-dense (B_PAD, 128) store
    h2 = jnp.dot(h1, w2_ref[...], preferred_element_type=jnp.float32) + b2_ref[...]
    out_ref[...] = h2.astype(out_ref.dtype)


def mlp_forward(ids, mask, emb, w1, b1, w2, b2):
    B, S = ids.shape
    V, n_in = emb.shape
    n_mid = w1.shape[1]
    n_out = w2.shape[1]

    # ---- wrapper-side prep (tiny, exact) ------------------------------------
    # counts[b, v] = #occurrences of token v in ids[b]  (== one-hot sum over S,
    # so counts @ E == embd(ids).sum(dim=1), including masked positions, exactly
    # as the PyTorch forward does).
    one_hot = (ids[:, :, None] == jnp.arange(V, dtype=ids.dtype)[None, None, :])
    counts = one_hot.astype(jnp.float32).sum(axis=1)                  # (B, V)
    denom = mask.astype(jnp.float32).sum(axis=1, keepdims=True)       # (B, 1)
    counts_scaled = counts / denom                                    # fold masked-mean divide

    # Pad batch to a full sublane and n_out to a full 128-lane slab.
    B_PAD = max(SUBLANE, ((B + SUBLANE - 1) // SUBLANE) * SUBLANE)
    c_pad = jnp.zeros((B_PAD, V), jnp.float32).at[:B, :].set(counts_scaled)
    w2p = jnp.zeros((n_mid, N_PAD), jnp.float32).at[:, :n_out].set(w2.astype(jnp.float32))
    b2p = jnp.zeros((1, N_PAD), jnp.float32).at[0, :n_out].set(b2.astype(jnp.float32))
    b1r = b1.reshape(1, n_mid).astype(jnp.float32)
    embf = emb.astype(jnp.float32)
    w1f = w1.astype(jnp.float32)

    # ---- single-step pallas_call: everything resident in VMEM ---------------
    grid_spec = pl.GridSpec(
        grid=(1,),
        in_specs=[
            pl.BlockSpec((B_PAD, V), lambda i: (0, 0)),        # scaled counts
            pl.BlockSpec((V, n_in), lambda i: (0, 0)),         # embedding table
            pl.BlockSpec((n_in, n_mid), lambda i: (0, 0)),     # W1
            pl.BlockSpec((1, n_mid), lambda i: (0, 0)),        # b1
            pl.BlockSpec((n_mid, N_PAD), lambda i: (0, 0)),    # W2 (padded)
            pl.BlockSpec((1, N_PAD), lambda i: (0, 0)),        # b2 (padded)
        ],
        out_specs=pl.BlockSpec((B_PAD, N_PAD), lambda i: (0, 0)),
    )

    cost = pl.CostEstimate(
        flops=2 * B_PAD * (V * n_in + n_in * n_mid + n_mid * N_PAD),
        transcendentals=B_PAD * n_mid,
        bytes_accessed=4 * (B_PAD * V + V * n_in + n_in * n_mid + n_mid
                            + n_mid * N_PAD + N_PAD + B_PAD * N_PAD),
    )

    out = pl.pallas_call(
        mlp_kernel,
        grid_spec=grid_spec,
        out_shape=jax.ShapeDtypeStruct((B_PAD, N_PAD), jnp.float32),
        compiler_params=pltpu.CompilerParams(
            dimension_semantics=("arbitrary",),
            vmem_limit_bytes=32 * 1024 * 1024,   # footprint <1 MiB; safe on v5e/v6e/v7x
        ),
        cost_estimate=cost,
    )(c_pad, embf, w1f, b1r, w2p, b2p)

    return out[:B, :n_out]


def reference_forward(ids, mask, emb, w1, b1, w2, b2):
    e = emb[ids]                                   # (B, S, n_in)
    x2 = e.sum(axis=1)                             # (B, n_in)
    mask2 = mask.astype(jnp.float32).sum(axis=1, keepdims=True)
    x3 = x2 / mask2
    h1 = jnp.tanh(x3 @ w1 + b1)
    return h1 @ w2 + b2


if __name__ == "__main__":
    key = jax.random.PRNGKey(0)
    B, S = 2, 8                 # batch, sequence length
    V = 32                      # vocab size (len(word_to_id))
    n_in, n_mid, n_out = 256, 128, 2

    k_emb, k_ids, k_mask, k_w1, k_b1, k_w2, k_b2 = jax.random.split(key, 7)

    emb = jax.random.normal(k_emb, (V, n_in), jnp.float32) * 0.1
    ids = jax.random.randint(k_ids, (B, S), 0, V, jnp.int32)
    # mask: first few positions valid (at least one valid per row)
    lens = jax.random.randint(k_mask, (B,), 1, S + 1, jnp.int32)
    mask = (jnp.arange(S)[None, :] < lens[:, None]).astype(jnp.float32)

    # PyTorch nn.Linear stores W as (out, in); we store the transpose (in, out).
    w1 = jax.random.normal(k_w1, (n_in, n_mid), jnp.float32) * 0.05
    b1 = jax.random.normal(k_b1, (n_mid,), jnp.float32) * 0.05
    w2 = jax.random.normal(k_w2, (n_mid, n_out), jnp.float32) * 0.05
    b2 = jax.random.normal(k_b2, (n_out,), jnp.float32) * 0.05

    out = mlp_forward(ids, mask, emb, w1, b1, w2, b2)
    out = jax.block_until_ready(out)

    ref = reference_forward(ids, mask, emb, w1, b1, w2, b2)
    assert out.shape == (B, n_out)
    # exact f32 math throughout (no approx reciprocal) -> tight tolerance
    assert jnp.allclose(out, ref, atol=1e-4, rtol=1e-4), (out, ref)
    print("KERNEL_OK")
</pallas_src>

<mosaic_0001>
module attributes {stable_mosaic.version = 11 : i64} {
  func.func @mlp_kernel(%arg0: i32, %arg1: memref<8x32xf32, #tpu.memory_space<vmem>>, %arg2: memref<32x256xf32, #tpu.memory_space<vmem>>, %arg3: memref<256x128xf32, #tpu.memory_space<vmem>>, %arg4: memref<1x128xf32, #tpu.memory_space<vmem>>, %arg5: memref<128x128xf32, #tpu.memory_space<vmem>>, %arg6: memref<1x128xf32, #tpu.memory_space<vmem>>, %arg7: memref<8x128xf32, #tpu.memory_space<vmem>>) attributes {dimension_semantics = [#tpu.dimension_semantics<arbitrary>], iteration_bounds = array<i64: 1>, scalar_prefetch = 0 : i64, scratch_operands = 0 : i64, tpu.core_type = #tpu.core_type<tc>, window_params = [{pipeline_mode = #tpu.pipeline_mode<synchronous>, transform_indices = @transform_0, window_bounds = array<i64: 8, 32>}, {pipeline_mode = #tpu.pipeline_mode<synchronous>, transform_indices = @transform_1, window_bounds = array<i64: 32, 256>}, {pipeline_mode = #tpu.pipeline_mode<synchronous>, transform_indices = @transform_2, window_bounds = array<i64: 256, 128>}, {pipeline_mode = #tpu.pipeline_mode<synchronous>, transform_indices = @transform_3, window_bounds = array<i64: 1, 128>}, {pipeline_mode = #tpu.pipeline_mode<synchronous>, transform_indices = @transform_4, window_bounds = array<i64: 128, 128>}, {pipeline_mode = #tpu.pipeline_mode<synchronous>, transform_indices = @transform_5, window_bounds = array<i64: 1, 128>}, {pipeline_mode = #tpu.pipeline_mode<synchronous>, transform_indices = @transform_6, window_bounds = array<i64: 8, 128>}]} {
    %c0 = arith.constant 0 : index
    %c0_0 = arith.constant 0 : index
    %0 = vector.load %arg1[%c0, %c0_0] : memref<8x32xf32, #tpu.memory_space<vmem>>, vector<8x32xf32>
    %c0_1 = arith.constant 0 : index
    %c0_2 = arith.constant 0 : index
    %1 = vector.load %arg2[%c0_1, %c0_2] : memref<32x256xf32, #tpu.memory_space<vmem>>, vector<32x256xf32>
    %cst = arith.constant dense<0.000000e+00> : vector<8x256xf32>
    %2 = tpu.matmul %0, %1, %cst {dimension_numbers = #tpu.dot_dimension_numbers<[1], [0], [0], [1], [0, 0, 1, 1], [], []>} : vector<8x32xf32>, vector<32x256xf32>, vector<8x256xf32> -> vector<8x256xf32>
    %c0_3 = arith.constant 0 : index
    %c0_4 = arith.constant 0 : index
    %3 = vector.load %arg3[%c0_3, %c0_4] : memref<256x128xf32, #tpu.memory_space<vmem>>, vector<256x128xf32>
    %cst_5 = arith.constant dense<0.000000e+00> : vector<8x128xf32>
    %4 = tpu.matmul %2, %3, %cst_5 {dimension_numbers = #tpu.dot_dimension_numbers<[1], [0], [0], [1], [0, 0, 1, 1], [], []>} : vector<8x256xf32>, vector<256x128xf32>, vector<8x128xf32> -> vector<8x128xf32>
    %c0_6 = arith.constant 0 : index
    %c0_7 = arith.constant 0 : index
    %5 = vector.load %arg4[%c0_6, %c0_7] : memref<1x128xf32, #tpu.memory_space<vmem>>, vector<1x128xf32>
    %6 = vector.broadcast %5 : vector<1x128xf32> to vector<8x128xf32>
    %7 = arith.addf %4, %6 : vector<8x128xf32>
    %8 = math.tanh %7 : vector<8x128xf32>
    %c0_8 = arith.constant 0 : index
    %c0_9 = arith.constant 0 : index
    %9 = vector.load %arg5[%c0_8, %c0_9] : memref<128x128xf32, #tpu.memory_space<vmem>>, vector<128x128xf32>
    %cst_10 = arith.constant dense<0.000000e+00> : vector<8x128xf32>
    %10 = tpu.matmul %8, %9, %cst_10 {dimension_numbers = #tpu.dot_dimension_numbers<[1], [0], [0], [1], [0, 0, 1, 1], [], []>} : vector<8x128xf32>, vector<128x128xf32>, vector<8x128xf32> -> vector<8x128xf32>
    %c0_11 = arith.constant 0 : index
    %c0_12 = arith.constant 0 : index
    %11 = vector.load %arg6[%c0_11, %c0_12] : memref<1x128xf32, #tpu.memory_space<vmem>>, vector<1x128xf32>
    %12 = vector.broadcast %11 : vector<1x128xf32> to vector<8x128xf32>
    %13 = arith.addf %10, %12 : vector<8x128xf32>
    %c0_13 = arith.constant 0 : index
    %c0_14 = arith.constant 0 : index
    %14 = vector.load %arg7[%c0_13, %c0_14] : memref<8x128xf32, #tpu.memory_space<vmem>>, vector<8x128xf32>
    tpu.vector_store %arg7[%c0_13, %c0_14], %13 {strides = array<i32>} : memref<8x128xf32, #tpu.memory_space<vmem>>, vector<8x128xf32>,
    return
  }
  func.func @transform_0(%arg0: i32) -> (i32, i32) {
    %c0_i32 = arith.constant 0 : i32
    %c0_i32_0 = arith.constant 0 : i32
    %c0_i32_1 = arith.constant 0 : i32
    return %c0_i32, %c0_i32_0 : i32, i32
  }
  func.func @transform_1(%arg0: i32) -> (i32, i32) {
    %c0_i32 = arith.constant 0 : i32
    %c0_i32_0 = arith.constant 0 : i32
    %c0_i32_1 = arith.constant 0 : i32
    return %c0_i32, %c0_i32_0 : i32, i32
  }
  func.func @transform_2(%arg0: i32) -> (i32, i32) {
    %c0_i32 = arith.constant 0 : i32
    %c0_i32_0 = arith.constant 0 : i32
    %c0_i32_1 = arith.constant 0 : i32
    return %c0_i32, %c0_i32_0 : i32, i32
  }
  func.func @transform_3(%arg0: i32) -> (i32, i32) {
    %c0_i32 = arith.constant 0 : i32
    %c0_i32_0 = arith.constant 0 : i32
    %c0_i32_1 = arith.constant 0 : i32
    return %c0_i32, %c0_i32_0 : i32, i32
  }
  func.func @transform_4(%arg0: i32) -> (i32, i32) {
    %c0_i32 = arith.constant 0 : i32
    %c0_i32_0 = arith.constant 0 : i32
    %c0_i32_1 = arith.constant 0 : i32
    return %c0_i32, %c0_i32_0 : i32, i32
  }
  func.func @transform_5(%arg0: i32) -> (i32, i32) {
    %c0_i32 = arith.constant 0 : i32
    %c0_i32_0 = arith.constant 0 : i32
    %c0_i32_1 = arith.constant 0 : i32
    return %c0_i32, %c0_i32_0 : i32, i32
  }
  func.func @transform_6(%arg0: i32) -> (i32, i32) {
    %c0_i32 = arith.constant 0 : i32
    %c0_i32_0 = arith.constant 0 : i32
    %c0_i32_1 = arith.constant 0 : i32
    return %c0_i32, %c0_i32_0 : i32, i32
  }
}

</mosaic_0001>

<llo_original>
// kernel: tpu_custom_call.1
$region0: #{tpu_custom_call.1}
  #allocation0 [shape = 'u32[]', space=smem, size = 0x4, offset = 0x4, fixed_abs, tag = 'smem constant byte address 0x4 - core index']
  #allocation1 [shape = 'u32[144,128]{1,0:T(1,128)}', space=vmem, size = 0x12000, scoped, tag = 'internal scratch']
  %s0 = inlined_call_operand.hbm [shape: f32[8,32], index: 0, kind: input, shape index: {}]
  %s1 = inlined_call_operand.hbm [shape: f32[32,256], index: 1, kind: input, shape index: {}]
  %s2 = inlined_call_operand.hbm [shape: f32[256,128], index: 2, kind: input, shape index: {}]
  %s3 = inlined_call_operand.vmem [shape: f32[1,128], index: 3, kind: input, shape index: {}]
  %s4 = inlined_call_operand.hbm [shape: f32[128,128], index: 4, kind: input, shape index: {}]
  %s5 = inlined_call_operand.vmem [shape: f32[1,128], index: 5, kind: input, shape index: {}]
  %s6 = inlined_call_operand.hbm [shape: f32[8,128], index: 6, kind: output, shape index: {}]
  %s7 = sld [smem:[#allocation0]]
  $region50: #{tpu_custom_call.1} parent=0
    _
  %s9 = ssub.s32 1, %s7
  %s10 = scalar_select 0, %s9, %s7
  $region1: #{tpu_custom_call.1} parent=0
    #allocation2 [shape = 'u8[4096]{0}', space=vmem, size = 0x1000, scoped, tag = 'input window, operand 0, single buffered']
    #allocation3 [shape = 's32[1]{0}', space=sflag, size = 0x4, scoped, tag = 'scoped memory for tpu_custom_call.1']
    #allocation4 [shape = 's32[1]{0}', space=sflag, size = 0x4, scoped, tag = 'scoped memory for tpu_custom_call.1']
    #allocation5 [shape = 'u8[32768]{0}', space=vmem, size = 0x8000, scoped, tag = 'input window, operand 1, single buffered']
    #allocation6 [shape = 's32[1]{0}', space=sflag, size = 0x4, scoped, tag = 'scoped memory for tpu_custom_call.1']
    #allocation7 [shape = 'u8[131072]{0}', space=vmem, size = 0x20000, scoped, tag = 'input window, operand 2, single buffered']
    #allocation8 [shape = 'u8[65536]{0}', space=vmem, size = 0x10000, scoped, tag = 'input window, operand 4, single buffered']
    #allocation9 [shape = 's32[1]{0}', space=sflag, size = 0x4, scoped, tag = 'scoped memory for tpu_custom_call.1']
    #allocation10 [shape = 'u8[4096]{0}', space=vmem, size = 0x1000, scoped, tag = 'output window, operand 0, single buffered']
    %11 = vsyncpa [#allocation3], 0
    %12 = vsyncpa [#allocation6], 0
    %13 = vsyncpa [#allocation9], 0
    %14 = vsyncpa [#allocation4], 0
    // Predicated region
    $region2: #{tpu_custom_call.1} parent=1 // pred_check
      _
    $region3: #{tpu_custom_call.1} parent=1 // pred_check_branch
      %16 = sbr.rel (0) target = $region5
    $region4: #{tpu_custom_call.1} parent=1 // pred_region
      %s18 = ssub.s32 128, 128
      %19 = vsyncadd [#allocation3], %s18
      %s21 = sshll.u32 [#allocation2], 4
      %s22 = int_to_ptr.vmem [resolvable:$true] %s21
      %24 = dma.hbm_to_vmem [thread:$0]  %s0, 128, %s22, [#allocation3]
    $region5: #{tpu_custom_call.1} parent=1 // pred_fallthru
      _
    // Predicated region
    $region6: #{tpu_custom_call.1} parent=1 // pred_check
      _
    $region7: #{tpu_custom_call.1} parent=1 // pred_check_branch
      %26 = sbr.rel (0) target = $region9
    $region8: #{tpu_custom_call.1} parent=1 // pred_region
      %s28 = ssub.s32 1024, 1024
      %29 = vsyncadd [#allocation6], %s28
      %s30 = sshll.u32 [#allocation5], 4
      %s31 = int_to_ptr.vmem [resolvable:$true] %s30
      %36 = dma.hbm_to_vmem [thread:$0]  %s1, 1024, %s31, [#allocation6], 256, 256, 16
    $region9: #{tpu_custom_call.1} parent=1 // pred_fallthru
      _
    // Predicated region
    $region10: #{tpu_custom_call.1} parent=1 // pred_check
      _
    $region11: #{tpu_custom_call.1} parent=1 // pred_check_branch
      %38 = sbr.rel (0) target = $region13
    $region12: #{tpu_custom_call.1} parent=1 // pred_region
      %s40 = ssub.s32 4096, 4096
      %41 = vsyncadd [#allocation6], %s40
      %s42 = sshll.u32 [#allocation7], 4
      %s43 = int_to_ptr.vmem [resolvable:$true] %s42
      %48 = dma.hbm_to_vmem [thread:$0]  %s2, 4096, %s43, [#allocation6], 128, 128, 8
    $region13: #{tpu_custom_call.1} parent=1 // pred_fallthru
      _
    // Predicated region
    $region14: #{tpu_custom_call.1} parent=1 // pred_check
      _
    $region15: #{tpu_custom_call.1} parent=1 // pred_check_branch
      %50 = sbr.rel (0) target = $region17
    $region16: #{tpu_custom_call.1} parent=1 // pred_region
      _
    $region17: #{tpu_custom_call.1} parent=1 // pred_fallthru
      _
    // Predicated region
    $region18: #{tpu_custom_call.1} parent=1 // pred_check
      _
    $region19: #{tpu_custom_call.1} parent=1 // pred_check_branch
      %52 = sbr.rel (0) target = $region21
    $region20: #{tpu_custom_call.1} parent=1 // pred_region
      %s54 = ssub.s32 2048, 2048
      %55 = vsyncadd [#allocation9], %s54
      %s56 = sshll.u32 [#allocation8], 4
      %s57 = int_to_ptr.vmem [resolvable:$true] %s56
      %62 = dma.hbm_to_vmem [thread:$0]  %s4, 2048, %s57, [#allocation9], 128, 128, 8
    $region21: #{tpu_custom_call.1} parent=1 // pred_fallthru
      _
    // Predicated region
    $region22: #{tpu_custom_call.1} parent=1 // pred_check
      _
    $region23: #{tpu_custom_call.1} parent=1 // pred_check_branch
      %64 = sbr.rel (0) target = $region25
    $region24: #{tpu_custom_call.1} parent=1 // pred_region
      _
    $region25: #{tpu_custom_call.1} parent=1 // pred_fallthru
      _
    // Predicated region
    $region26: #{tpu_custom_call.1} parent=1 // pred_check
      _
    $region27: #{tpu_custom_call.1} parent=1 // pred_check_branch
      %66 = sbr.rel (0) target = $region29
    $region28: #{tpu_custom_call.1} parent=1 // pred_region
      %67 = dma.done [#allocation3], 128
    $region29: #{tpu_custom_call.1} parent=1 // pred_fallthru
      _
    // Predicated region
    $region30: #{tpu_custom_call.1} parent=1 // pred_check
      _
    $region31: #{tpu_custom_call.1} parent=1 // pred_check_branch
      %69 = sbr.rel (0) target = $region33
    $region32: #{tpu_custom_call.1} parent=1 // pred_region
      %70 = dma.done [#allocation6], 1024
    $region33: #{tpu_custom_call.1} parent=1 // pred_fallthru
      _
    // Predicated region
    $region34: #{tpu_custom_call.1} parent=1 // pred_check
      _
    $region35: #{tpu_custom_call.1} parent=1 // pred_check_branch
      %72 = sbr.rel (0) target = $region37
    $region36: #{tpu_custom_call.1} parent=1 // pred_region
      %73 = dma.done [#allocation6], 4096
    $region37: #{tpu_custom_call.1} parent=1 // pred_fallthru
      _
    // Predicated region
    $region38: #{tpu_custom_call.1} parent=1 // pred_check
      _
    $region39: #{tpu_custom_call.1} parent=1 // pred_check_branch
      %75 = sbr.rel (0) target = $region41
    $region40: #{tpu_custom_call.1} parent=1 // pred_region
      %76 = dma.done [#allocation9], 2048
    $region41: #{tpu_custom_call.1} parent=1 // pred_fallthru
      _
    %v77 = vld [vmem:[#allocation2] sm:$0xff]
    %v78 = vld [vmem:[#allocation5] sm:$0xff]
    %v79 = vld [vmem:[#allocation5 + $0x8] sm:$0xff]
    %v80 = vld [vmem:[#allocation5 + $0x10] sm:$0xff]
    %v81 = vld [vmem:[#allocation5 + $0x18] sm:$0xff]
    %v82 = vld [vmem:[#allocation5 + $0x20] sm:$0xff]
    %v83 = vld [vmem:[#allocation5 + $0x28] sm:$0xff]
    %v84 = vld [vmem:[#allocation5 + $0x30] sm:$0xff]
    %v85 = vld [vmem:[#allocation5 + $0x38] sm:$0xff]
    %vm86 = vcmask 261120
    %v88 = vsel %vm86, %v77, 0
    %90 = vmatprep.subr.mxu0 %v79
    %91 = vmatpush1.msra.mxu0 %v78
    %92 = vmatprep.subr.mxu0 %v81
    %93 = vmatpush1.msra.mxu0 %v80
    %94 = vmatprep.subr.mxu0 %v83
    %95 = vmatpush1.msra.mxu0 %v82
    %96 = vmatprep.subr.mxu0 %v85
    %97 = vmatpush1.msra.mxu0 %v84
    %98 = vmatprep.subr.mxu0 0.0
    %99 = vmatpush1.msra.mxu0 0.0
    %100 = vmatprep.subr.mxu0 0.0
    %101 = vmatpush1.msra.mxu0 0.0
    %102 = vmatprep.subr.mxu0 0.0
    %103 = vmatpush1.msra.mxu0 0.0
    %104 = vmatprep.subr.mxu0 0.0
    %105 = vmatpush1.msra.mxu0 0.0
    %106 = vmatprep.subr.mxu0 0.0
    %107 = vmatpush1.msra.mxu0 0.0
    %108 = vmatprep.subr.mxu0 0.0
    %109 = vmatpush1.msra.mxu0 0.0
    %110 = vmatprep.subr.mxu0 0.0
    %111 = vmatpush1.msra.mxu0 0.0
    %112 = vmatprep.subr.mxu0 0.0
    %113 = vmatpush1.msra.mxu0 0.0
    %114 = vmatprep.subr.mxu0 0.0
    %115 = vmatpush1.msra.mxu0 0.0
    %116 = vmatprep.subr.mxu0 0.0
    %117 = vmatpush1.msra.mxu0 0.0
    %118 = vmatprep.subr.mxu0 0.0
    %119 = vmatpush1.msra.mxu0 0.0
    %120 = vmatprep.subr.mxu0 0.0
    %121 = vmatpush1.msra.mxu0 0.0
    %122 = vmatprep.subr.mxu0 0.0
    %123 = vmatpush1.msra.mxu0 0.0
    %124 = vmatprep.subr.mxu0 0.0
    %125 = vmatpush1.msra.mxu0 0.0
    %126 = vmatprep.subr.mxu0 0.0
    %127 = vmatpush1.msra.mxu0 0.0
    %128 = vmatprep.subr.mxu0 0.0
    %129 = vmatpush1.msra.mxu0 0.0
    %130 = vmatprep.subr.mxu0 0.0
    %131 = vmatpush1.msra.mxu0 0.0
    %132 = vmatprep.subr.mxu0 0.0
    %133 = vmatpush1.msra.mxu0 0.0
    %134 = vmatprep.subr.mxu0 0.0
    %135 = vmatpush1.msra.mxu0 0.0
    %136 = vmatprep.subr.mxu0 0.0
    %137 = vmatpush1.msra.mxu0 0.0
    %138 = vmatprep.subr.mxu0 0.0
    %139 = vmatpush1.msra.mxu0 0.0
    %140 = vmatprep.subr.mxu0 0.0
    %141 = vmatpush1.msra.mxu0 0.0
    %142 = vmatprep.subr.mxu0 0.0
    %143 = vmatpush1.msra.mxu0 0.0
    %144 = vmatprep.subr.mxu0 0.0
    %145 = vmatpush1.msra.mxu0 0.0
    %146 = vmatprep.subr.mxu0 0.0
    %147 = vmatpush1.msra.mxu0 0.0
    %148 = vmatprep.subr.mxu0 0.0
    %149 = vmatpush1.msra.mxu0 0.0
    %150 = vmatprep.subr.mxu0 0.0
    %151 = vmatpush1.msra.mxu0 0.0
    %152 = vmatprep.subr.mxu0 0.0
    %153 = vmatpush1.msra.mxu0 0.0
    %154 = vmatprep.mubr.f32.mxu0 0.0
    %155 = vmatmul.mubr.f32.gmra.mrb[0].mxu0 %v88
    %v156 = vpop.f32.mrb[0].mxu0
    %v157 = vadd.f32 0.0, %v156
    %v158 = vpop.f32.mrb[0].mxu0
    %v159 = vadd.f32 0.0, %v158
    %160 = vdwg.mxu0
    %v161 = vld [vmem:[#allocation7] sm:$0xff]
    %v162 = vld [vmem:[#allocation7 + $0x8] sm:$0xff]
    %v163 = vld [vmem:[#allocation7 + $0x10] sm:$0xff]
    %v164 = vld [vmem:[#allocation7 + $0x18] sm:$0xff]
    %v165 = vld [vmem:[#allocation7 + $0x20] sm:$0xff]
    %v166 = vld [vmem:[#allocation7 + $0x28] sm:$0xff]
    %v167 = vld [vmem:[#allocation7 + $0x30] sm:$0xff]
    %v168 = vld [vmem:[#allocation7 + $0x38] sm:$0xff]
    %v169 = vld [vmem:[#allocation7 + $0x40] sm:$0xff]
    %v170 = vld [vmem:[#allocation7 + $0x48] sm:$0xff]
    %v171 = vld [vmem:[#allocation7 + $0x50] sm:$0xff]
    %v172 = vld [vmem:[#allocation7 + $0x58] sm:$0xff]
    %v173 = vld [vmem:[#allocation7 + $0x60] sm:$0xff]
    %v174 = vld [vmem:[#allocation7 + $0x68] sm:$0xff]
    %v175 = vld [vmem:[#allocation7 + $0x70] sm:$0xff]
    %v176 = vld [vmem:[#allocation7 + $0x78] sm:$0xff]
    %v177 = vld [vmem:[#allocation7 + $0x80] sm:$0xff]
    %v178 = vld [vmem:[#allocation7 + $0x88] sm:$0xff]
    %v179 = vld [vmem:[#allocation7 + $0x90] sm:$0xff]
    %v180 = vld [vmem:[#allocation7 + $0x98] sm:$0xff]
    %v181 = vld [vmem:[#allocation7 + $0xa0] sm:$0xff]
    %v182 = vld [vmem:[#allocation7 + $0xa8] sm:$0xff]
    %v183 = vld [vmem:[#allocation7 + $0xb0] sm:$0xff]
    %v184 = vld [vmem:[#allocation7 + $0xb8] sm:$0xff]
    %v185 = vld [vmem:[#allocation7 + $0xc0] sm:$0xff]
    %v186 = vld [vmem:[#allocation7 + $0xc8] sm:$0xff]
    %v187 = vld [vmem:[#allocation7 + $0xd0] sm:$0xff]
    %v188 = vld [vmem:[#allocation7 + $0xd8] sm:$0xff]
    %v189 = vld [vmem:[#allocation7 + $0xe0] sm:$0xff]
    %v190 = vld [vmem:[#allocation7 + $0xe8] sm:$0xff]
    %v191 = vld [vmem:[#allocation7 + $0xf0] sm:$0xff]
    %v192 = vld [vmem:[#allocation7 + $0xf8] sm:$0xff]
    %v193 = vld [vmem:[%s3] sm:$0x1]
    %v195 = vlaneseq
    %v196 = vshrl.u32 %v195, 7
    %v197 = vsub.s32 0, %v196
    %v198 = vrot.slane %v193, %v197
    %200 = vmatprep.subr.mxu0 0.0
    %201 = vmatpush1.msra.mxu0 %v161
    %202 = vmatprep.subr.mxu0 0.0
    %203 = vmatpush1.msra.mxu0 %v162
    %204 = vmatprep.subr.mxu0 0.0
    %205 = vmatpush1.msra.mxu0 %v163
    %206 = vmatprep.subr.mxu0 0.0
    %207 = vmatpush1.msra.mxu0 %v164
    %208 = vmatprep.subr.mxu0 0.0
    %209 = vmatpush1.msra.mxu0 %v165
    %210 = vmatprep.subr.mxu0 0.0
    %211 = vmatpush1.msra.mxu0 %v166
    %212 = vmatprep.subr.mxu0 0.0
    %213 = vmatpush1.msra.mxu0 %v167
    %214 = vmatprep.subr.mxu0 0.0
    %215 = vmatpush1.msra.mxu0 %v168
    %216 = vmatprep.subr.mxu0 0.0
    %217 = vmatpush1.msra.mxu0 %v169
    %218 = vmatprep.subr.mxu0 0.0
    %219 = vmatpush1.msra.mxu0 %v170
    %220 = vmatprep.subr.mxu0 0.0
    %221 = vmatpush1.msra.mxu0 %v171
    %222 = vmatprep.subr.mxu0 0.0
    %223 = vmatpush1.msra.mxu0 %v172
    %224 = vmatprep.subr.mxu0 0.0
    %225 = vmatpush1.msra.mxu0 %v173
    %226 = vmatprep.subr.mxu0 0.0
    %227 = vmatpush1.msra.mxu0 %v174
    %228 = vmatprep.subr.mxu0 0.0
    %229 = vmatpush1.msra.mxu0 %v175
    %230 = vmatprep.subr.mxu0 0.0
    %231 = vmatpush1.msra.mxu0 %v176
    %232 = vmatprep.subr.mxu0 0.0
    %233 = vmatpush1.msra.mxu0 %v177
    %234 = vmatprep.subr.mxu0 0.0
    %235 = vmatpush1.msra.mxu0 %v178
    %236 = vmatprep.subr.mxu0 0.0
    %237 = vmatpush1.msra.mxu0 %v179
    %238 = vmatprep.subr.mxu0 0.0
    %239 = vmatpush1.msra.mxu0 %v180
    %240 = vmatprep.subr.mxu0 0.0
    %241 = vmatpush1.msra.mxu0 %v181
    %242 = vmatprep.subr.mxu0 0.0
    %243 = vmatpush1.msra.mxu0 %v182
    %244 = vmatprep.subr.mxu0 0.0
    %245 = vmatpush1.msra.mxu0 %v183
    %246 = vmatprep.subr.mxu0 0.0
    %247 = vmatpush1.msra.mxu0 %v184
    %248 = vmatprep.subr.mxu0 0.0
    %249 = vmatpush1.msra.mxu0 %v185
    %250 = vmatprep.subr.mxu0 0.0
    %251 = vmatpush1.msra.mxu0 %v186
    %252 = vmatprep.subr.mxu0 0.0
    %253 = vmatpush1.msra.mxu0 %v187
    %254 = vmatprep.subr.mxu0 0.0
    %255 = vmatpush1.msra.mxu0 %v188
    %256 = vmatprep.subr.mxu0 0.0
    %257 = vmatpush1.msra.mxu0 %v189
    %258 = vmatprep.subr.mxu0 0.0
    %259 = vmatpush1.msra.mxu0 %v190
    %260 = vmatprep.subr.mxu0 0.0
    %261 = vmatpush1.msra.mxu0 %v191
    %262 = vmatprep.subr.mxu0 0.0
    %263 = vmatpush1.msra.mxu0 %v192
    %264 = vmatprep.mubr.f32.mxu0 %v159
    %265 = vmatmul.mubr.f32.gmra.mrb[0].mxu0 %v157
    %v266 = vpop.f32.mrb[0].mxu0
    %v267 = vadd.f32 %v198, %v266
    %v268 = vpop.f32.mrb[0].mxu0
    %269 = vdwg.mxu0
    %v270 = vtanh.pop %v267
    %v271 = vld [vmem:[#allocation8] sm:$0xff]
    %v272 = vld [vmem:[#allocation8 + $0x8] sm:$0xff]
    %v273 = vld [vmem:[#allocation8 + $0x10] sm:$0xff]
    %v274 = vld [vmem:[#allocation8 + $0x18] sm:$0xff]
    %v275 = vld [vmem:[#allocation8 + $0x20] sm:$0xff]
    %v276 = vld [vmem:[#allocation8 + $0x28] sm:$0xff]
    %v277 = vld [vmem:[#allocation8 + $0x30] sm:$0xff]
    %v278 = vld [vmem:[#allocation8 + $0x38] sm:$0xff]
    %v279 = vld [vmem:[#allocation8 + $0x40] sm:$0xff]
    %v280 = vld [vmem:[#allocation8 + $0x48] sm:$0xff]
    %v281 = vld [vmem:[#allocation8 + $0x50] sm:$0xff]
    %v282 = vld [vmem:[#allocation8 + $0x58] sm:$0xff]
    %v283 = vld [vmem:[#allocation8 + $0x60] sm:$0xff]
    %v284 = vld [vmem:[#allocation8 + $0x68] sm:$0xff]
    %v285 = vld [vmem:[#allocation8 + $0x70] sm:$0xff]
    %v286 = vld [vmem:[#allocation8 + $0x78] sm:$0xff]
    %v287 = vld [vmem:[%s5] sm:$0x1]
    %v289 = vlaneseq
    %v290 = vshrl.u32 %v289, 7
    %v291 = vsub.s32 0, %v290
    %v292 = vrot.slane %v287, %v291
    %294 = vmatprep.subr.mxu0 0.0
    %295 = vmatpush1.msra.mxu0 %v271
    %296 = vmatprep.subr.mxu0 0.0
    %297 = vmatpush1.msra.mxu0 %v272
    %298 = vmatprep.subr.mxu0 0.0
    %299 = vmatpush1.msra.mxu0 %v273
    %300 = vmatprep.subr.mxu0 0.0
    %301 = vmatpush1.msra.mxu0 %v274
    %302 = vmatprep.subr.mxu0 0.0
    %303 = vmatpush1.msra.mxu0 %v275
    %304 = vmatprep.subr.mxu0 0.0
    %305 = vmatpush1.msra.mxu0 %v276
    %306 = vmatprep.subr.mxu0 0.0
    %307 = vmatpush1.msra.mxu0 %v277
    %308 = vmatprep.subr.mxu0 0.0
    %309 = vmatpush1.msra.mxu0 %v278
    %310 = vmatprep.subr.mxu0 0.0
    %311 = vmatpush1.msra.mxu0 %v279
    %312 = vmatprep.subr.mxu0 0.0
    %313 = vmatpush1.msra.mxu0 %v280
    %314 = vmatprep.subr.mxu0 0.0
    %315 = vmatpush1.msra.mxu0 %v281
    %316 = vmatprep.subr.mxu0 0.0
    %317 = vmatpush1.msra.mxu0 %v282
    %318 = vmatprep.subr.mxu0 0.0
    %319 = vmatpush1.msra.mxu0 %v283
    %320 = vmatprep.subr.mxu0 0.0
    %321 = vmatpush1.msra.mxu0 %v284
    %322 = vmatprep.subr.mxu0 0.0
    %323 = vmatpush1.msra.mxu0 %v285
    %324 = vmatprep.subr.mxu0 0.0
    %325 = vmatpush1.msra.mxu0 %v286
    %326 = vmatprep.subr.mxu0 0.0
    %327 = vmatpush1.msra.mxu0 0.0
    %328 = vmatprep.subr.mxu0 0.0
    %329 = vmatpush1.msra.mxu0 0.0
    %330 = vmatprep.subr.mxu0 0.0
    %331 = vmatpush1.msra.mxu0 0.0
    %332 = vmatprep.subr.mxu0 0.0
    %333 = vmatpush1.msra.mxu0 0.0
    %334 = vmatprep.subr.mxu0 0.0
    %335 = vmatpush1.msra.mxu0 0.0
    %336 = vmatprep.subr.mxu0 0.0
    %337 = vmatpush1.msra.mxu0 0.0
    %338 = vmatprep.subr.mxu0 0.0
    %339 = vmatpush1.msra.mxu0 0.0
    %340 = vmatprep.subr.mxu0 0.0
    %341 = vmatpush1.msra.mxu0 0.0
    %342 = vmatprep.subr.mxu0 0.0
    %343 = vmatpush1.msra.mxu0 0.0
    %344 = vmatprep.subr.mxu0 0.0
    %345 = vmatpush1.msra.mxu0 0.0
    %346 = vmatprep.subr.mxu0 0.0
    %347 = vmatpush1.msra.mxu0 0.0
    %348 = vmatprep.subr.mxu0 0.0
    %349 = vmatpush1.msra.mxu0 0.0
    %350 = vmatprep.subr.mxu0 0.0
    %351 = vmatpush1.msra.mxu0 0.0
    %352 = vmatprep.subr.mxu0 0.0
    %353 = vmatpush1.msra.mxu0 0.0
    %354 = vmatprep.subr.mxu0 0.0
    %355 = vmatpush1.msra.mxu0 0.0
    %356 = vmatprep.subr.mxu0 0.0
    %357 = vmatpush1.msra.mxu0 0.0
    %358 = vmatprep.mubr.f32.mxu0 0.0
    %359 = vmatmul.mubr.f32.gmra.mrb[0].mxu0 %v270
    %v360 = vpop.f32.mrb[0].mxu0
    %v361 = vadd.f32 %v292, %v360
    %v362 = vpop.f32.mrb[0].mxu0
    %363 = vdwg.mxu0
    %364 = vst [vmem:[#allocation10] sm:$0xff] %v361
    // Predicated region
    $region42: #{tpu_custom_call.1} parent=1 // pred_check
      _
    $region43: #{tpu_custom_call.1} parent=1 // pred_check_branch
      %366 = sbr.rel (0) target = $region45
    $region44: #{tpu_custom_call.1} parent=1 // pred_region
      %s368 = ssub.s32 128, 128
      %369 = vsyncadd [#allocation4], %s368
      %s371 = sshll.u32 [#allocation10], 4
      %s372 = int_to_ptr.vmem [resolvable:$true] %s371
      %374 = dma.vmem_to_hbm [thread:$0]  %s372, 128, %s6, [#allocation4]
    $region45: #{tpu_custom_call.1} parent=1 // pred_fallthru
      _
    // Predicated region
    $region46: #{tpu_custom_call.1} parent=1 // pred_check
      _
    $region47: #{tpu_custom_call.1} parent=1 // pred_check_branch
      %376 = sbr.rel (0) target = $region49
    $region48: #{tpu_custom_call.1} parent=1 // pred_region
      %377 = dma.done [#allocation4], 128
    $region49: #{tpu_custom_call.1} parent=1 // pred_fallthru
      _
    %378 = vsyncpa [#allocation3], 1
    %379 = vsyncpa [#allocation6], 1
    %380 = vsyncpa [#allocation9], 1
    %381 = vsyncpa [#allocation4], 1

</llo_original>
